<compile_context>
chip_gen: v7x
topology: tpu7x:2x2x1
jax: 0.10.0
libtpu: 0.0.40
codegen_flags: <defaults>
</compile_context>

<pallas_src>
import functools

import jax
import jax.numpy as jnp
from jax.experimental import pallas as pl
from jax.experimental.pallas import tpu as pltpu


def _round_up(n: int, m: int) -> int:
    return ((n + m - 1) // m) * m


def _cdiv(a: int, b: int) -> int:
    return -(-a // b)


def _ae_kernel(x_ref,
               w1_ref, b1_ref,
               w2_ref, b2_ref,
               w3_ref, b3_ref,
               w4_ref, b4_ref,
               o_ref):
    # Matmul operands are cast to the weight storage dtype (bf16 or f32);
    # accumulation, bias-add and ReLU stay in f32 (VALU slack -> free filler).
    wdt = w1_ref.dtype

    def lin(a, w_ref, b_ref):
        a = a if a.dtype == wdt else a.astype(wdt)
        return jnp.dot(a, w_ref[...], preferred_element_type=jnp.float32) + b_ref[...]

    h = jnp.maximum(lin(x_ref[...], w1_ref, b1_ref), 0.0)   # encoder L1
    h = jnp.maximum(lin(h, w2_ref, b2_ref), 0.0)             # encoder L2
    h = jnp.maximum(lin(h, w3_ref, b3_ref), 0.0)             # decoder L1
    o_ref[...] = lin(h, w4_ref, b4_ref).astype(o_ref.dtype)  # decoder L2


@functools.partial(jax.jit, static_argnames=("tile_b", "fold", "use_bf16"))
def pallas_ae_forward(x, params, *, tile_b=2048, fold=4, use_bf16=False):
    """x: (B, D) f32. params: 4 pairs of (W_t, b); W_t is (in, out), b is (1, out).

    fold: batch-folding factor (block-diagonal weights). Use 4 on v6e/v7x
    (256-wide MXU), 2 on v5e (128-wide MXU). Auto-capped so folded K <= 256.
    """
    B, D = x.shape
    (w1, b1), (w2, b2), (w3, b3), (w4, b4) = params
    H1, H2 = w1.shape[1], w2.shape[1]          # D-20, D-40

    # --- hidden-dim padding to sublane multiples (zero columns stay zero
    #     through bias-add and ReLU and contribute nothing downstream)
    H1p = _round_up(H1, 8)
    H2p = _round_up(H2, 8)

    # --- fold factor: never let folded K exceed one 256-wide MXU tile
    max_k = max(D, H1p, H2p)
    F = max(1, min(int(fold), max(1, 256 // max_k)))

    w_dtype = jnp.bfloat16 if use_bf16 else jnp.float32

    def pad2(a, rows, cols):
        return jnp.pad(a, ((0, rows - a.shape[0]), (0, cols - a.shape[1])))

    def bdiag(w):  # block-diagonal fold: (K, N) -> (F*K, F*N)
        return jnp.kron(jnp.eye(F, dtype=w.dtype), w)

    w1p = bdiag(pad2(w1, D,   H1p)).astype(w_dtype)
    w2p = bdiag(pad2(w2, H1p, H2p)).astype(w_dtype)
    w3p = bdiag(pad2(w3, H2p, H1p)).astype(w_dtype)
    w4p = bdiag(pad2(w4, H1p, D)).astype(w_dtype)
    b1p = jnp.tile(pad2(b1, 1, H1p), (1, F)).astype(jnp.float32)
    b2p = jnp.tile(pad2(b2, 1, H2p), (1, F)).astype(jnp.float32)
    b3p = jnp.tile(pad2(b3, 1, H1p), (1, F)).astype(jnp.float32)
    b4p = jnp.tile(pad2(b4, 1, D), (1, F)).astype(jnp.float32)

    # --- adaptive batch tiling: tb multiple of 8*F, small padding waste,
    #     >= 2 grid steps when B allows it (keeps both v7x TensorCores busy)
    gran = 8 * F
    target = max(gran, _round_up(int(tile_b), gran))
    n_steps = _cdiv(B, target)
    if n_steps == 1 and B > gran:
        n_steps = 2
    tb = _round_up(_cdiv(B, n_steps), gran)
    Bp = _round_up(B, tb)
    grid = (Bp // tb,)
    tbf = tb // F                              # folded rows per grid step

    x_in = x.astype(jnp.float32)
    if Bp != B:
        x_in = jnp.pad(x_in, ((0, Bp - B), (0, 0)))
    x_f = x_in.reshape(Bp // F, F * D)         # free, contiguous reshape

    # --- cost estimate (useful math, padded dims) + generation-aware VMEM budget
    weight_bytes = int(sum(a.size * a.dtype.itemsize
                           for a in (w1p, b1p, w2p, b2p, w3p, b3p, w4p, b4p)))
    flops = 2 * Bp * (D * H1p + H1p * H2p + H2p * H1p + H1p * D)
    bytes_accessed = Bp * D * 4 * 2 + weight_bytes
    cost = pl.CostEstimate(flops=int(flops), transcendentals=0,
                           bytes_accessed=int(bytes_accessed))

    try:
        vmem_cap = int(pltpu.get_tpu_info().vmem_capacity_bytes)
    except Exception:
        vmem_cap = 64 * 1024 * 1024
    io_tile_bytes = 2 * (tbf * F * D * 4) * 2          # double-buffered x + out
    interm_bytes = tbf * F * (H1p + H2p + H1p + D) * 4  # f32 intermediates
    need = io_tile_bytes + 2 * weight_bytes + interm_bytes
    vmem_limit = min(max(2 * need, 16 * 1024 * 1024), int(0.9 * vmem_cap))

    # --- specs: x/out block over the folded batch; weights/biases are full-array
    #     blocks replicated to every step (constant index_map)
    x_spec = pl.BlockSpec((tbf, F * D), lambda i: (i, 0))
    out_spec = pl.BlockSpec((tbf, F * D), lambda i: (i, 0))

    def rep(a):
        return pl.BlockSpec(a.shape, lambda i: (0, 0))

    out_f = pl.pallas_call(
        _ae_kernel,
        out_shape=jax.ShapeDtypeStruct((Bp // F, F * D), jnp.float32),
        grid_spec=pltpu.PrefetchScalarGridSpec(
            num_scalar_prefetch=0,
            grid=grid,
            in_specs=[x_spec,
                      rep(w1p), rep(b1p),
                      rep(w2p), rep(b2p),
                      rep(w3p), rep(b3p),
                      rep(w4p), rep(b4p)],
            out_specs=out_spec,
        ),
        compiler_params=pltpu.CompilerParams(
            dimension_semantics=("parallel",),
            vmem_limit_bytes=vmem_limit,
        ),
        cost_estimate=cost,
    )(x_f, w1p, b1p, w2p, b2p, w3p, b3p, w4p, b4p)

    # unfold batch (free reshape) and drop batch padding
    return out_f.reshape(Bp, D)[:B]


def init_ae_params(key, in_samples):
    """Deterministic init mirroring nn.Linear shapes.

    PyTorch nn.Linear(in, out) has weight (out, in), bias (out,).
    We store the weight transposed as (in, out) and bias as (1, out).
    """
    dims = [
        (in_samples, in_samples - 20),
        (in_samples - 20, in_samples - 40),
        (in_samples - 40, in_samples - 20),
        (in_samples - 20, in_samples),
    ]
    params = []
    for (fan_in, fan_out) in dims:
        key, kw, kb = jax.random.split(key, 3)
        bound = 1.0 / jnp.sqrt(jnp.float32(fan_in))
        w_t = jax.random.uniform(kw, (fan_in, fan_out), jnp.float32, -bound, bound)
        b = jax.random.uniform(kb, (1, fan_out), jnp.float32, -bound, bound)
        params.append((w_t, b))
    return tuple(params)


def reference_forward(x, params):
    (w1, b1), (w2, b2), (w3, b3), (w4, b4) = params
    h = jnp.maximum(x @ w1 + b1, 0.0)
    h = jnp.maximum(h @ w2 + b2, 0.0)
    h = jnp.maximum(h @ w3 + b3, 0.0)
    return h @ w4 + b4


if __name__ == "__main__":
    key = jax.random.PRNGKey(0)
    in_samples = 64   # feature length of the 1D time-series window
    batch = 67        # not a tile multiple -> exercises padding + fold reshape

    kx, kp = jax.random.split(key)
    x = jax.random.normal(kx, (batch, in_samples), jnp.float32)
    params = init_ae_params(kp, in_samples)
    ref = reference_forward(x, params)

    # default folded path (fold=4, v6e/v7x): tile_b=32 -> 3-step grid here,
    # exercising weight replication, batch padding and the fold reshape.
    out = pallas_ae_forward(x, params, tile_b=32)
    out = jax.block_until_ready(out)
    assert out.shape == (batch, in_samples)
    assert jnp.allclose(out, ref, atol=1e-4, rtol=1e-4), "fold=4 mismatch vs JAX reference"

    # v5e-style fold=2 path
    out2 = jax.block_until_ready(pallas_ae_forward(x, params, tile_b=64, fold=2))
    assert jnp.allclose(out2, ref, atol=1e-4, rtol=1e-4), "fold=2 mismatch vs JAX reference"

    # bf16 weights / bf16 matmul operands; x and output stay f32 (dtype contract kept)
    out_bf16 = jax.block_until_ready(pallas_ae_forward(x, params, tile_b=32, use_bf16=True))
    assert out_bf16.shape == (batch, in_samples)
    assert out_bf16.dtype == jnp.float32
    assert jnp.allclose(out_bf16, ref, atol=1e-1, rtol=1e-1), "bf16 mismatch vs JAX reference"

    print("KERNEL_OK")
</pallas_src>

<mosaic_0001>
module attributes {stable_mosaic.version = 11 : i64} {
  func.func @_ae_kernel(%arg0: i32, %arg1: memref<8x256xf32, #tpu.memory_space<vmem>>, %arg2: memref<256x192xf32, #tpu.memory_space<vmem>>, %arg3: memref<1x192xf32, #tpu.memory_space<vmem>>, %arg4: memref<192x96xf32, #tpu.memory_space<vmem>>, %arg5: memref<1x96xf32, #tpu.memory_space<vmem>>, %arg6: memref<96x192xf32, #tpu.memory_space<vmem>>, %arg7: memref<1x192xf32, #tpu.memory_space<vmem>>, %arg8: memref<192x256xf32, #tpu.memory_space<vmem>>, %arg9: memref<1x256xf32, #tpu.memory_space<vmem>>, %arg10: memref<8x256xf32, #tpu.memory_space<vmem>>) attributes {dimension_semantics = [#tpu.dimension_semantics<parallel>], iteration_bounds = array<i64: 3>, scalar_prefetch = 0 : i64, scratch_operands = 0 : i64, tpu.core_type = #tpu.core_type<tc>, window_params = [{transform_indices = @transform_0, window_bounds = array<i64: 8, 256>}, {pipeline_mode = #tpu.pipeline_mode<synchronous>, transform_indices = @transform_1, window_bounds = array<i64: 256, 192>}, {pipeline_mode = #tpu.pipeline_mode<synchronous>, transform_indices = @transform_2, window_bounds = array<i64: 1, 192>}, {pipeline_mode = #tpu.pipeline_mode<synchronous>, transform_indices = @transform_3, window_bounds = array<i64: 192, 96>}, {pipeline_mode = #tpu.pipeline_mode<synchronous>, transform_indices = @transform_4, window_bounds = array<i64: 1, 96>}, {pipeline_mode = #tpu.pipeline_mode<synchronous>, transform_indices = @transform_5, window_bounds = array<i64: 96, 192>}, {pipeline_mode = #tpu.pipeline_mode<synchronous>, transform_indices = @transform_6, window_bounds = array<i64: 1, 192>}, {pipeline_mode = #tpu.pipeline_mode<synchronous>, transform_indices = @transform_7, window_bounds = array<i64: 192, 256>}, {pipeline_mode = #tpu.pipeline_mode<synchronous>, transform_indices = @transform_8, window_bounds = array<i64: 1, 256>}, {transform_indices = @transform_9, window_bounds = array<i64: 8, 256>}]} {
    %c0 = arith.constant 0 : index
    %c0_0 = arith.constant 0 : index
    %0 = vector.load %arg1[%c0, %c0_0] : memref<8x256xf32, #tpu.memory_space<vmem>>, vector<8x256xf32>
    %c0_1 = arith.constant 0 : index
    %c0_2 = arith.constant 0 : index
    %1 = vector.load %arg2[%c0_1, %c0_2] : memref<256x192xf32, #tpu.memory_space<vmem>>, vector<256x192xf32>
    %cst = arith.constant dense<0.000000e+00> : vector<8x192xf32>
    %2 = tpu.matmul %0, %1, %cst {dimension_numbers = #tpu.dot_dimension_numbers<[1], [0], [0], [1], [0, 0, 1, 1], [], []>} : vector<8x256xf32>, vector<256x192xf32>, vector<8x192xf32> -> vector<8x192xf32>
    %c0_3 = arith.constant 0 : index
    %c0_4 = arith.constant 0 : index
    %3 = vector.load %arg3[%c0_3, %c0_4] : memref<1x192xf32, #tpu.memory_space<vmem>>, vector<1x192xf32>
    %4 = vector.broadcast %3 : vector<1x192xf32> to vector<8x192xf32>
    %5 = arith.addf %2, %4 : vector<8x192xf32>
    %cst_5 = arith.constant 0.000000e+00 : f32
    %6 = vector.broadcast %cst_5 : f32 to vector<8x192xf32>
    %7 = arith.maximumf %5, %6 : vector<8x192xf32>
    %c0_6 = arith.constant 0 : index
    %c0_7 = arith.constant 0 : index
    %8 = vector.load %arg4[%c0_6, %c0_7] : memref<192x96xf32, #tpu.memory_space<vmem>>, vector<192x96xf32>
    %cst_8 = arith.constant dense<0.000000e+00> : vector<8x96xf32>
    %9 = tpu.matmul %7, %8, %cst_8 {dimension_numbers = #tpu.dot_dimension_numbers<[1], [0], [0], [1], [0, 0, 1, 1], [], []>} : vector<8x192xf32>, vector<192x96xf32>, vector<8x96xf32> -> vector<8x96xf32>
    %c0_9 = arith.constant 0 : index
    %c0_10 = arith.constant 0 : index
    %10 = vector.load %arg5[%c0_9, %c0_10] : memref<1x96xf32, #tpu.memory_space<vmem>>, vector<1x96xf32>
    %11 = vector.broadcast %10 : vector<1x96xf32> to vector<8x96xf32>
    %12 = arith.addf %9, %11 : vector<8x96xf32>
    %cst_11 = arith.constant 0.000000e+00 : f32
    %13 = vector.broadcast %cst_11 : f32 to vector<8x96xf32>
    %14 = arith.maximumf %12, %13 : vector<8x96xf32>
    %c0_12 = arith.constant 0 : index
    %c0_13 = arith.constant 0 : index
    %15 = vector.load %arg6[%c0_12, %c0_13] : memref<96x192xf32, #tpu.memory_space<vmem>>, vector<96x192xf32>
    %cst_14 = arith.constant dense<0.000000e+00> : vector<8x192xf32>
    %16 = tpu.matmul %14, %15, %cst_14 {dimension_numbers = #tpu.dot_dimension_numbers<[1], [0], [0], [1], [0, 0, 1, 1], [], []>} : vector<8x96xf32>, vector<96x192xf32>, vector<8x192xf32> -> vector<8x192xf32>
    %c0_15 = arith.constant 0 : index
    %c0_16 = arith.constant 0 : index
    %17 = vector.load %arg7[%c0_15, %c0_16] : memref<1x192xf32, #tpu.memory_space<vmem>>, vector<1x192xf32>
    %18 = vector.broadcast %17 : vector<1x192xf32> to vector<8x192xf32>
    %19 = arith.addf %16, %18 : vector<8x192xf32>
    %cst_17 = arith.constant 0.000000e+00 : f32
    %20 = vector.broadcast %cst_17 : f32 to vector<8x192xf32>
    %21 = arith.maximumf %19, %20 : vector<8x192xf32>
    %c0_18 = arith.constant 0 : index
    %c0_19 = arith.constant 0 : index
    %22 = vector.load %arg8[%c0_18, %c0_19] : memref<192x256xf32, #tpu.memory_space<vmem>>, vector<192x256xf32>
    %cst_20 = arith.constant dense<0.000000e+00> : vector<8x256xf32>
    %23 = tpu.matmul %21, %22, %cst_20 {dimension_numbers = #tpu.dot_dimension_numbers<[1], [0], [0], [1], [0, 0, 1, 1], [], []>} : vector<8x192xf32>, vector<192x256xf32>, vector<8x256xf32> -> vector<8x256xf32>
    %c0_21 = arith.constant 0 : index
    %c0_22 = arith.constant 0 : index
    %24 = vector.load %arg9[%c0_21, %c0_22] : memref<1x256xf32, #tpu.memory_space<vmem>>, vector<1x256xf32>
    %25 = vector.broadcast %24 : vector<1x256xf32> to vector<8x256xf32>
    %26 = arith.addf %23, %25 : vector<8x256xf32>
    %c0_23 = arith.constant 0 : index
    %c0_24 = arith.constant 0 : index
    %27 = vector.load %arg10[%c0_23, %c0_24] : memref<8x256xf32, #tpu.memory_space<vmem>>, vector<8x256xf32>
    tpu.vector_store %arg10[%c0_23, %c0_24], %26 {strides = array<i32>} : memref<8x256xf32, #tpu.memory_space<vmem>>, vector<8x256xf32>,
    return
  }
  func.func @transform_0(%arg0: i32) -> (i32, i32) {
    %c0_i32 = arith.constant 0 : i32
    %c0_i32_0 = arith.constant 0 : i32
    return %arg0, %c0_i32 : i32, i32
  }
  func.func @transform_1(%arg0: i32) -> (i32, i32) {
    %c0_i32 = arith.constant 0 : i32
    %c0_i32_0 = arith.constant 0 : i32
    %c0_i32_1 = arith.constant 0 : i32
    return %c0_i32, %c0_i32_0 : i32, i32
  }
  func.func @transform_2(%arg0: i32) -> (i32, i32) {
    %c0_i32 = arith.constant 0 : i32
    %c0_i32_0 = arith.constant 0 : i32
    %c0_i32_1 = arith.constant 0 : i32
    return %c0_i32, %c0_i32_0 : i32, i32
  }
  func.func @transform_3(%arg0: i32) -> (i32, i32) {
    %c0_i32 = arith.constant 0 : i32
    %c0_i32_0 = arith.constant 0 : i32
    %c0_i32_1 = arith.constant 0 : i32
    return %c0_i32, %c0_i32_0 : i32, i32
  }
  func.func @transform_4(%arg0: i32) -> (i32, i32) {
    %c0_i32 = arith.constant 0 : i32
    %c0_i32_0 = arith.constant 0 : i32
    %c0_i32_1 = arith.constant 0 : i32
    return %c0_i32, %c0_i32_0 : i32, i32
  }
  func.func @transform_5(%arg0: i32) -> (i32, i32) {
    %c0_i32 = arith.constant 0 : i32
    %c0_i32_0 = arith.constant 0 : i32
    %c0_i32_1 = arith.constant 0 : i32
    return %c0_i32, %c0_i32_0 : i32, i32
  }
  func.func @transform_6(%arg0: i32) -> (i32, i32) {
    %c0_i32 = arith.constant 0 : i32
    %c0_i32_0 = arith.constant 0 : i32
    %c0_i32_1 = arith.constant 0 : i32
    return %c0_i32, %c0_i32_0 : i32, i32
  }
  func.func @transform_7(%arg0: i32) -> (i32, i32) {
    %c0_i32 = arith.constant 0 : i32
    %c0_i32_0 = arith.constant 0 : i32
    %c0_i32_1 = arith.constant 0 : i32
    return %c0_i32, %c0_i32_0 : i32, i32
  }
  func.func @transform_8(%arg0: i32) -> (i32, i32) {
    %c0_i32 = arith.constant 0 : i32
    %c0_i32_0 = arith.constant 0 : i32
    %c0_i32_1 = arith.constant 0 : i32
    return %c0_i32, %c0_i32_0 : i32, i32
  }
  func.func @transform_9(%arg0: i32) -> (i32, i32) {
    %c0_i32 = arith.constant 0 : i32
    %c0_i32_0 = arith.constant 0 : i32
    return %arg0, %c0_i32 : i32, i32
  }
}

</mosaic_0001>

<llo_original>
// kernel: pallas_ae_forward.1
$region0: #{pallas_ae_forward.1}
  #allocation0 [shape = 'u32[]', space=smem, size = 0x4, offset = 0x4, fixed_abs, tag = 'smem constant byte address 0x4 - core index']
  #allocation1 [shape = 'u32[144,128]{1,0:T(1,128)}', space=vmem, size = 0x12000, scoped, tag = 'internal scratch']
  %s0 = inlined_call_operand.vmem [shape: f32[24,256], index: 0, kind: input, shape index: {}]
  %s1 = inlined_call_operand.vmem [shape: f32[256,192], index: 1, kind: input, shape index: {}]
  %s2 = inlined_call_operand.vmem [shape: f32[1,192], index: 2, kind: input, shape index: {}]
  %s3 = inlined_call_operand.vmem [shape: f32[192,96], index: 3, kind: input, shape index: {}]
  %s4 = inlined_call_operand.vmem [shape: f32[1,96], index: 4, kind: input, shape index: {}]
  %s5 = inlined_call_operand.vmem [shape: f32[96,192], index: 5, kind: input, shape index: {}]
  %s6 = inlined_call_operand.vmem [shape: f32[1,192], index: 6, kind: input, shape index: {}]
  %s7 = inlined_call_operand.vmem [shape: f32[192,256], index: 7, kind: input, shape index: {}]
  %s8 = inlined_call_operand.vmem [shape: f32[1,256], index: 8, kind: input, shape index: {}]
  %s9 = inlined_call_operand.vmem [shape: f32[24,256], index: 9, kind: output, shape index: {}]
  %s10 = sld [smem:[#allocation0]]
  $region69: #{pallas_ae_forward.1} parent=0
    _
  %s12 = ssub.s32 1, %s10
  %s13 = scalar_select 0, %s12, %s10
  loop: start=0, step=1, limit=5
  $region2: #{pallas_ae_forward.1} parent=0 // loop_pre_header
    _
  $region3: #{pallas_ae_forward.1} parent=0 // loop_header
    %s15 = sphi 0, %s19
    %p16 = scmp.ge.s32.totalorder %s15, 5
    %s25 = sphi 0, %s27
    %s28 = sphi 0, %s25
    %s29 = sphi 0, %s28
    %s45 = sphi 0, %s29
    %s49 = sphi 0, %s49
    %s51 = sphi 0, %s49
    %s52 = sphi 0, %s51
    %s66 = sphi 0, %s52
    %s70 = sphi 0, %s70
    %s72 = sphi 0, %s70
    %s73 = sphi 0, %s72
    %s87 = sphi 0, %s73
    %s91 = sphi 0, %s91
    %s93 = sphi 0, %s91
    %s94 = sphi 0, %s93
    %s108 = sphi 0, %s94
    %s112 = sphi 0, %s112
    %s114 = sphi 0, %s112
    %s115 = sphi 0, %s114
    %s129 = sphi 0, %s115
    %s133 = sphi 0, %s133
    %s135 = sphi 0, %s133
    %s136 = sphi 0, %s135
    %s150 = sphi 0, %s136
    %s154 = sphi 0, %s154
    %s156 = sphi 0, %s154
    %s157 = sphi 0, %s156
    %s171 = sphi 0, %s157
    %s175 = sphi 0, %s175
    %s177 = sphi 0, %s175
    %s178 = sphi 0, %s177
    %s192 = sphi 0, %s178
    %s196 = sphi 0, %s196
    %s198 = sphi 0, %s196
    %s199 = sphi 0, %s198
    %s213 = sphi 0, %s199
    %s219 = sphi 0, %s221
    %s222 = sphi 0, %s219
    %s223 = sphi 0, %s222
    %s239 = sphi 0, %s223
  $region4: #{pallas_ae_forward.1} parent=0 // loop_header_branch
    %18 = sbr.rel (%p16) target = $region8
  $region5: #{pallas_ae_forward.1} parent=0 // loop_body
    %s20 = ssub.s32 %s15, 1
    %s21 = ssub.s32 %s15, 2
    %s22 = sadd.s32 %s15, 1
    %s23 = ssub.s32 %s15, %s22
    %p24 = scmp.eq.s32.totalorder %s23, 0
    %s26 = sadd.s32 %s25, 1
    %s27 = scalar_select %p24, %s25, %s26
    %p30 = pneg %p24
    %p31 = scmp.eq.s32.totalorder %s15, 2
    %p32 = por %p30, %p31
    %p33 = scmp.ne.s32.totalorder %s25, %s28
    %p34 = scmp.eq.s32.totalorder %s15, 0
    %p35 = por %p33, %p34
    %p36 = scmp.ne.s32.totalorder %s25, %s28
    %p37 = scmp.eq.s32.totalorder %s20, 2
    %p38 = por %p36, %p37
    %p39 = scmp.ne.s32.totalorder %s28, %s29
    %p40 = scmp.eq.s32.totalorder %s20, 0
    %p41 = por %p39, %p40
    %p42 = scmp.ne.s32.totalorder %s28, %s29
    %p43 = scmp.eq.s32.totalorder %s21, 2
    %p44 = por %p42, %p43
    %p46 = scmp.ne.s32.totalorder %s29, %s45
    %p47 = scmp.eq.s32.totalorder %s21, 0
    %p48 = por %p46, %p47
    %s50 = sadd.s32 %s49, 1
    %p53 = scmp.eq.s32.totalorder %s15, 2
    %p54 = scmp.ne.s32.totalorder %s49, %s51
    %p55 = scmp.eq.s32.totalorder %s15, 0
    %p56 = por %p54, %p55
    %p57 = scmp.ne.s32.totalorder %s49, %s51
    %p58 = scmp.eq.s32.totalorder %s20, 2
    %p59 = por %p57, %p58
    %p60 = scmp.ne.s32.totalorder %s51, %s52
    %p61 = scmp.eq.s32.totalorder %s20, 0
    %p62 = por %p60, %p61
    %p63 = scmp.ne.s32.totalorder %s51, %s52
    %p64 = scmp.eq.s32.totalorder %s21, 2
    %p65 = por %p63, %p64
    %p67 = scmp.ne.s32.totalorder %s52, %s66
    %p68 = scmp.eq.s32.totalorder %s21, 0
    %p69 = por %p67, %p68
    %s71 = sadd.s32 %s70, 1
    %p74 = scmp.eq.s32.totalorder %s15, 2
    %p75 = scmp.ne.s32.totalorder %s70, %s72
    %p76 = scmp.eq.s32.totalorder %s15, 0
    %p77 = por %p75, %p76
    %p78 = scmp.ne.s32.totalorder %s70, %s72
    %p79 = scmp.eq.s32.totalorder %s20, 2
    %p80 = por %p78, %p79
    %p81 = scmp.ne.s32.totalorder %s72, %s73
    %p82 = scmp.eq.s32.totalorder %s20, 0
    %p83 = por %p81, %p82
    %p84 = scmp.ne.s32.totalorder %s72, %s73
    %p85 = scmp.eq.s32.totalorder %s21, 2
    %p86 = por %p84, %p85
    %p88 = scmp.ne.s32.totalorder %s73, %s87
    %p89 = scmp.eq.s32.totalorder %s21, 0
    %p90 = por %p88, %p89
    %s92 = sadd.s32 %s91, 1
    %p95 = scmp.eq.s32.totalorder %s15, 2
    %p96 = scmp.ne.s32.totalorder %s91, %s93
    %p97 = scmp.eq.s32.totalorder %s15, 0
    %p98 = por %p96, %p97
    %p99 = scmp.ne.s32.totalorder %s91, %s93
    %p100 = scmp.eq.s32.totalorder %s20, 2
    %p101 = por %p99, %p100
    %p102 = scmp.ne.s32.totalorder %s93, %s94
    %p103 = scmp.eq.s32.totalorder %s20, 0
    %p104 = por %p102, %p103
    %p105 = scmp.ne.s32.totalorder %s93, %s94
    %p106 = scmp.eq.s32.totalorder %s21, 2
    %p107 = por %p105, %p106
    %p109 = scmp.ne.s32.totalorder %s94, %s108
    %p110 = scmp.eq.s32.totalorder %s21, 0
    %p111 = por %p109, %p110
    %s113 = sadd.s32 %s112, 1
    %p116 = scmp.eq.s32.totalorder %s15, 2
    %p117 = scmp.ne.s32.totalorder %s112, %s114
    %p118 = scmp.eq.s32.totalorder %s15, 0
    %p119 = por %p117, %p118
    %p120 = scmp.ne.s32.totalorder %s112, %s114
    %p121 = scmp.eq.s32.totalorder %s20, 2
    %p122 = por %p120, %p121
    %p123 = scmp.ne.s32.totalorder %s114, %s115
    %p124 = scmp.eq.s32.totalorder %s20, 0
    %p125 = por %p123, %p124
    %p126 = scmp.ne.s32.totalorder %s114, %s115
    %p127 = scmp.eq.s32.totalorder %s21, 2
    %p128 = por %p126, %p127
    %p130 = scmp.ne.s32.totalorder %s115, %s129
    %p131 = scmp.eq.s32.totalorder %s21, 0
    %p132 = por %p130, %p131
    %s134 = sadd.s32 %s133, 1
    %p137 = scmp.eq.s32.totalorder %s15, 2
    %p138 = scmp.ne.s32.totalorder %s133, %s135
    %p139 = scmp.eq.s32.totalorder %s15, 0
    %p140 = por %p138, %p139
    %p141 = scmp.ne.s32.totalorder %s133, %s135
    %p142 = scmp.eq.s32.totalorder %s20, 2
    %p143 = por %p141, %p142
    %p144 = scmp.ne.s32.totalorder %s135, %s136
    %p145 = scmp.eq.s32.totalorder %s20, 0
    %p146 = por %p144, %p145
    %p147 = scmp.ne.s32.totalorder %s135, %s136
    %p148 = scmp.eq.s32.totalorder %s21, 2
    %p149 = por %p147, %p148
    %p151 = scmp.ne.s32.totalorder %s136, %s150
    %p152 = scmp.eq.s32.totalorder %s21, 0
    %p153 = por %p151, %p152
    %s155 = sadd.s32 %s154, 1
    %p158 = scmp.eq.s32.totalorder %s15, 2
    %p159 = scmp.ne.s32.totalorder %s154, %s156
    %p160 = scmp.eq.s32.totalorder %s15, 0
    %p161 = por %p159, %p160
    %p162 = scmp.ne.s32.totalorder %s154, %s156
    %p163 = scmp.eq.s32.totalorder %s20, 2
    %p164 = por %p162, %p163
    %p165 = scmp.ne.s32.totalorder %s156, %s157
    %p166 = scmp.eq.s32.totalorder %s20, 0
    %p167 = por %p165, %p166
    %p168 = scmp.ne.s32.totalorder %s156, %s157
    %p169 = scmp.eq.s32.totalorder %s21, 2
    %p170 = por %p168, %p169
    %p172 = scmp.ne.s32.totalorder %s157, %s171
    %p173 = scmp.eq.s32.totalorder %s21, 0
    %p174 = por %p172, %p173
    %s176 = sadd.s32 %s175, 1
    %p179 = scmp.eq.s32.totalorder %s15, 2
    %p180 = scmp.ne.s32.totalorder %s175, %s177
    %p181 = scmp.eq.s32.totalorder %s15, 0
    %p182 = por %p180, %p181
    %p183 = scmp.ne.s32.totalorder %s175, %s177
    %p184 = scmp.eq.s32.totalorder %s20, 2
    %p185 = por %p183, %p184
    %p186 = scmp.ne.s32.totalorder %s177, %s178
    %p187 = scmp.eq.s32.totalorder %s20, 0
    %p188 = por %p186, %p187
    %p189 = scmp.ne.s32.totalorder %s177, %s178
    %p190 = scmp.eq.s32.totalorder %s21, 2
    %p191 = por %p189, %p190
    %p193 = scmp.ne.s32.totalorder %s178, %s192
    %p194 = scmp.eq.s32.totalorder %s21, 0
    %p195 = por %p193, %p194
    %s197 = sadd.s32 %s196, 1
    %p200 = scmp.eq.s32.totalorder %s15, 2
    %p201 = scmp.ne.s32.totalorder %s196, %s198
    %p202 = scmp.eq.s32.totalorder %s15, 0
    %p203 = por %p201, %p202
    %p204 = scmp.ne.s32.totalorder %s196, %s198
    %p205 = scmp.eq.s32.totalorder %s20, 2
    %p206 = por %p204, %p205
    %p207 = scmp.ne.s32.totalorder %s198, %s199
    %p208 = scmp.eq.s32.totalorder %s20, 0
    %p209 = por %p207, %p208
    %p210 = scmp.ne.s32.totalorder %s198, %s199
    %p211 = scmp.eq.s32.totalorder %s21, 2
    %p212 = por %p210, %p211
    %p214 = scmp.ne.s32.totalorder %s199, %s213
    %p215 = scmp.eq.s32.totalorder %s21, 0
    %p216 = por %p214, %p215
    %s217 = ssub.s32 %s15, %s22
    %p218 = scmp.eq.s32.totalorder %s217, 0
    %s220 = sadd.s32 %s219, 1
    %s221 = scalar_select %p218, %s219, %s220
    %p224 = pneg %p218
    %p225 = scmp.eq.s32.totalorder %s15, 2
    %p226 = por %p224, %p225
    %p227 = scmp.ne.s32.totalorder %s219, %s222
    %p228 = scmp.eq.s32.totalorder %s15, 0
    %p229 = por %p227, %p228
    %p230 = scmp.ne.s32.totalorder %s219, %s222
    %p231 = scmp.eq.s32.totalorder %s20, 2
    %p232 = por %p230, %p231
    %p233 = scmp.ne.s32.totalorder %s222, %s223
    %p234 = scmp.eq.s32.totalorder %s20, 0
    %p235 = por %p233, %p234
    %p236 = scmp.ne.s32.totalorder %s222, %s223
    %p237 = scmp.eq.s32.totalorder %s21, 2
    %p238 = por %p236, %p237
    %p240 = scmp.ne.s32.totalorder %s223, %s239
    %p241 = scmp.eq.s32.totalorder %s21, 0
    %p242 = por %p240, %p241
    %p243 = scmp.le.s32.totalorder 1, %s15
    %p244 = scmp.lt.s32.totalorder %s15, 4
    %p245 = pnand %p243, %p244
    %p246 = pneg %p245
    // Predicated region
    $region9: #{pallas_ae_forward.1} parent=5 // pred_check
      _
    $region10: #{pallas_ae_forward.1} parent=5 // pred_check_branch
      %248 = sbr.rel (%p245) target = $region12
    $region11: #{pallas_ae_forward.1} parent=5 // pred_region
      %s249 = ssub.s32 %s15, 1
      // Predicated region
      $region13: #{pallas_ae_forward.1} parent=11 // pred_check
        %p250 = pneg %p62
      $region14: #{pallas_ae_forward.1} parent=11 // pred_check_branch
        %252 = sbr.rel (%p250) target = $region16
      $region15: #{pallas_ae_forward.1} parent=11 // pred_region
        _
      $region16: #{pallas_ae_forward.1} parent=11 // pred_fallthru
        _
      // Predicated region
      $region17: #{pallas_ae_forward.1} parent=11 // pred_check
        %p253 = pneg %p83
      $region18: #{pallas_ae_forward.1} parent=11 // pred_check_branch
        %255 = sbr.rel (%p253) target = $region20
      $region19: #{pallas_ae_forward.1} parent=11 // pred_region
        _
      $region20: #{pallas_ae_forward.1} parent=11 // pred_fallthru
        _
      // Predicated region
      $region21: #{pallas_ae_forward.1} parent=11 // pred_check
        %p256 = pneg %p104
      $region22: #{pallas_ae_forward.1} parent=11 // pred_check_branch
        %258 = sbr.rel (%p256) target = $region24
      $region23: #{pallas_ae_forward.1} parent=11 // pred_region
        _
      $region24: #{pallas_ae_forward.1} parent=11 // pred_fallthru
        _
      // Predicated region
      $region25: #{pallas_ae_forward.1} parent=11 // pred_check
        %p259 = pneg %p125
      $region26: #{pallas_ae_forward.1} parent=11 // pred_check_branch
        %261 = sbr.rel (%p259) target = $region28
      $region27: #{pallas_ae_forward.1} parent=11 // pred_region
        _
      $region28: #{pallas_ae_forward.1} parent=11 // pred_fallthru
        _
      // Predicated region
      $region29: #{pallas_ae_forward.1} parent=11 // pred_check
        %p262 = pneg %p146
      $region30: #{pallas_ae_forward.1} parent=11 // pred_check_branch
        %264 = sbr.rel (%p262) target = $region32
      $region31: #{pallas_ae_forward.1} parent=11 // pred_region
        _
      $region32: #{pallas_ae_forward.1} parent=11 // pred_fallthru
        _
      // Predicated region
      $region33: #{pallas_ae_forward.1} parent=11 // pred_check
        %p265 = pneg %p167
      $region34: #{pallas_ae_forward.1} parent=11 // pred_check_branch
        %267 = sbr.rel (%p265) target = $region36
      $region35: #{pallas_ae_forward.1} parent=11 // pred_region
        _
      $region36: #{pallas_ae_forward.1} parent=11 // pred_fallthru
        _
      // Predicated region
      $region37: #{pallas_ae_forward.1} parent=11 // pred_check
        %p268 = pneg %p188
      $region38: #{pallas_ae_forward.1} parent=11 // pred_check_branch
        %270 = sbr.rel (%p268) target = $region40
      $region39: #{pallas_ae_forward.1} parent=11 // pred_region
        _
      $region40: #{pallas_ae_forward.1} parent=11 // pred_fallthru
        _
      // Predicated region
      $region41: #{pallas_ae_forward.1} parent=11 // pred_check
        %p271 = pneg %p209
      $region42: #{pallas_ae_forward.1} parent=11 // pred_check_branch
        %273 = sbr.rel (%p271) target = $region44
      $region43: #{pallas_ae_forward.1} parent=11 // pred_region
        _
      $region44: #{pallas_ae_forward.1} parent=11 // pred_fallthru
        _
    $region12: #{pallas_ae_forward.1} parent=5 // pred_fallthru
      _
    %p274 = scmp.lt.s32.totalorder %s15, 3
    // Predicated region
    $region45: #{pallas_ae_forward.1} parent=5 // pred_check
      %p275 = pneg %p274
    $region46: #{pallas_ae_forward.1} parent=5 // pred_check_branch
      %277 = sbr.rel (%p275) target = $region48
    $region47: #{pallas_ae_forward.1} parent=5 // pred_region
      // Predicated region
      $region49: #{pallas_ae_forward.1} parent=47 // pred_check
        %p278 = pneg %p35
      $region50: #{pallas_ae_forward.1} parent=47 // pred_check_branch
        %280 = sbr.rel (%p278) target = $region52
      $region51: #{pallas_ae_forward.1} parent=47 // pred_region
        %p281 = scmp.lt.s32.totalorder %s15, 2
        %s282 = scalar_select %p281, %s15, 2
        %s283 = smul.addr %s282, 2
        %s284 = smul.addr %s283, 8
        %s285 = scalar_lea.vmem %s0, %s284
      $region52: #{pallas_ae_forward.1} parent=47 // pred_fallthru
        _
    $region48: #{pallas_ae_forward.1} parent=5 // pred_fallthru
      _
    %p286 = scmp.le.s32.totalorder 1, %s15
    %p287 = scmp.lt.s32.totalorder %s15, 4
    %p288 = pnand %p286, %p287
    %p289 = pneg %p288
    // Predicated region
    $region53: #{pallas_ae_forward.1} parent=5 // pred_check
      _
    $region54: #{pallas_ae_forward.1} parent=5 // pred_check_branch
      %291 = sbr.rel (%p288) target = $region56
    $region55: #{pallas_ae_forward.1} parent=5 // pred_region
      %s292 = ssub.s32 %s15, 1
      %p293 = scmp.lt.s32.totalorder %s20, 2
      %s294 = scalar_select %p293, %s20, 2
      %s295 = smul.addr %s294, 2
      %s296 = smul.addr %s295, 8
      %s297 = scalar_lea.vmem %s0, %s296
      %p298 = pneg %p41
      %p299 = pneg %p38
      %p300 = pneg %p62
      %p301 = pneg %p59
      %p302 = pneg %p83
      %p303 = pneg %p80
      %p304 = pneg %p104
      %p305 = pneg %p101
      %p306 = pneg %p125
      %p307 = pneg %p122
      %p308 = pneg %p146
      %p309 = pneg %p143
      %p310 = pneg %p167
      %p311 = pneg %p164
      %p312 = pneg %p188
      %p313 = pneg %p185
      %p314 = pneg %p209
      %p315 = pneg %p206
      %p316 = pneg %p235
      %p317 = pneg %p232
      %p318 = scmp.lt.s32.totalorder %s20, 2
      %s319 = scalar_select %p318, %s20, 2
      %s320 = smul.addr %s319, 2
      %s321 = smul.addr %s320, 8
      %s322 = scalar_lea.vmem %s9, %s321
      %p323 = scmp.lt.s32.totalorder %s20, 2
      %s324 = scalar_select %p323, %s20, 2
      %s325 = smul.addr %s324, 2
      %s326 = smul.addr %s325, 8
      %s327 = scalar_lea.vmem %s0, %s326
      %p328 = scmp.lt.s32.totalorder %s20, 2
      %s329 = scalar_select %p328, %s20, 2
      %s330 = smul.addr %s329, 2
      %s331 = smul.addr %s330, 8
      %s332 = scalar_lea.vmem %s9, %s331
      %v333 = vld [vmem:[%s327] sm:$0xff]
      %v334 = vld [vmem:[%s327 + $0x8] sm:$0xff]
      %v335 = vld [vmem:[%s1] sm:$0xff]
      %v336 = vld [vmem:[%s1 + $0x8] sm:$0xff]
      %v337 = vld [vmem:[%s1 + $0x10] sm:$0xff]
      %v338 = vld [vmem:[%s1 + $0x18] sm:$0xff]
      %v339 = vld [vmem:[%s1 + $0x20] sm:$0xff]
      %v340 = vld [vmem:[%s1 + $0x28] sm:$0xff]
      %v341 = vld [vmem:[%s1 + $0x30] sm:$0xff]
      %v342 = vld [vmem:[%s1 + $0x38] sm:$0xff]
      %v343 = vld [vmem:[%s1 + $0x40] sm:$0xff]
      %v344 = vld [vmem:[%s1 + $0x48] sm:$0xff]
      %v345 = vld [vmem:[%s1 + $0x50] sm:$0xff]
      %v346 = vld [vmem:[%s1 + $0x58] sm:$0xff]
      %v347 = vld [vmem:[%s1 + $0x60] sm:$0xff]
      %v348 = vld [vmem:[%s1 + $0x68] sm:$0xff]
      %v349 = vld [vmem:[%s1 + $0x70] sm:$0xff]
      %v350 = vld [vmem:[%s1 + $0x78] sm:$0xff]
      %v351 = vld [vmem:[%s1 + $0x80] sm:$0xff]
      %v352 = vld [vmem:[%s1 + $0x88] sm:$0xff]
      %v353 = vld [vmem:[%s1 + $0x90] sm:$0xff]
      %v354 = vld [vmem:[%s1 + $0x98] sm:$0xff]
      %v355 = vld [vmem:[%s1 + $0xa0] sm:$0xff]
      %v356 = vld [vmem:[%s1 + $0xa8] sm:$0xff]
      %v357 = vld [vmem:[%s1 + $0xb0] sm:$0xff]
      %v358 = vld [vmem:[%s1 + $0xb8] sm:$0xff]
      %v359 = vld [vmem:[%s1 + $0xc0] sm:$0xff]
      %v360 = vld [vmem:[%s1 + $0xc8] sm:$0xff]
      %v361 = vld [vmem:[%s1 + $0xd0] sm:$0xff]
      %v362 = vld [vmem:[%s1 + $0xd8] sm:$0xff]
      %v363 = vld [vmem:[%s1 + $0xe0] sm:$0xff]
      %v364 = vld [vmem:[%s1 + $0xe8] sm:$0xff]
      %v365 = vld [vmem:[%s1 + $0xf0] sm:$0xff]
      %v366 = vld [vmem:[%s1 + $0xf8] sm:$0xff]
      %v367 = vld [vmem:[%s1 + $0x100] sm:$0xff]
      %v368 = vld [vmem:[%s1 + $0x108] sm:$0xff]
      %v369 = vld [vmem:[%s1 + $0x110] sm:$0xff]
      %v370 = vld [vmem:[%s1 + $0x118] sm:$0xff]
      %v371 = vld [vmem:[%s1 + $0x120] sm:$0xff]
      %v372 = vld [vmem:[%s1 + $0x128] sm:$0xff]
      %v373 = vld [vmem:[%s1 + $0x130] sm:$0xff]
      %v374 = vld [vmem:[%s1 + $0x138] sm:$0xff]
      %v375 = vld [vmem:[%s1 + $0x140] sm:$0xff]
      %v376 = vld [vmem:[%s1 + $0x148] sm:$0xff]
      %v377 = vld [vmem:[%s1 + $0x150] sm:$0xff]
      %v378 = vld [vmem:[%s1 + $0x158] sm:$0xff]
      %v379 = vld [vmem:[%s1 + $0x160] sm:$0xff]
      %v380 = vld [vmem:[%s1 + $0x168] sm:$0xff]
      %v381 = vld [vmem:[%s1 + $0x170] sm:$0xff]
      %v382 = vld [vmem:[%s1 + $0x178] sm:$0xff]
      %v383 = vld [vmem:[%s1 + $0x180] sm:$0xff]
      %v384 = vld [vmem:[%s1 + $0x188] sm:$0xff]
      %v385 = vld [vmem:[%s1 + $0x190] sm:$0xff]
      %v386 = vld [vmem:[%s1 + $0x198] sm:$0xff]
      %v387 = vld [vmem:[%s1 + $0x1a0] sm:$0xff]
      %v388 = vld [vmem:[%s1 + $0x1a8] sm:$0xff]
      %v389 = vld [vmem:[%s1 + $0x1b0] sm:$0xff]
      %v390 = vld [vmem:[%s1 + $0x1b8] sm:$0xff]
      %v391 = vld [vmem:[%s1 + $0x1c0] sm:$0xff]
      %v392 = vld [vmem:[%s1 + $0x1c8] sm:$0xff]
      %v393 = vld [vmem:[%s1 + $0x1d0] sm:$0xff]
      %v394 = vld [vmem:[%s1 + $0x1d8] sm:$0xff]
      %v395 = vld [vmem:[%s1 + $0x1e0] sm:$0xff]
      %v396 = vld [vmem:[%s1 + $0x1e8] sm:$0xff]
      %v397 = vld [vmem:[%s1 + $0x1f0] sm:$0xff]
      %v398 = vld [vmem:[%s1 + $0x1f8] sm:$0xff]
      %v399 = vld [vmem:[%s2] sm:$0x3]
      %v401 = vlaneseq
      %v402 = vshrl.u32 %v401, 7
      %v403 = vsub.s32 0, %v402
      %v404 = vrot.slane %v399, %v403
      %v405 = vlaneseq
      %v406 = vshrl.u32 %v405, 7
      %v407 = vsub.s32 1, %v406
      %v408 = vrot.slane %v399, %v407
      %411 = vmatprep.subr.mxu0 %v336
      %412 = vmatpush1.msra.mxu0 %v335
      %413 = vmatprep.subr.mxu0 %v338
      %414 = vmatpush1.msra.mxu0 %v337
      %415 = vmatprep.subr.mxu0 %v340
      %416 = vmatpush1.msra.mxu0 %v339
      %417 = vmatprep.subr.mxu0 %v342
      %418 = vmatpush1.msra.mxu0 %v341
      %419 = vmatprep.subr.mxu0 %v344
      %420 = vmatpush1.msra.mxu0 %v343
      %421 = vmatprep.subr.mxu0 %v346
      %422 = vmatpush1.msra.mxu0 %v345
      %423 = vmatprep.subr.mxu0 %v348
      %424 = vmatpush1.msra.mxu0 %v347
      %425 = vmatprep.subr.mxu0 %v350
      %426 = vmatpush1.msra.mxu0 %v349
      %427 = vmatprep.subr.mxu0 %v352
      %428 = vmatpush1.msra.mxu0 %v351
      %429 = vmatprep.subr.mxu0 %v354
      %430 = vmatpush1.msra.mxu0 %v353
      %431 = vmatprep.subr.mxu0 %v356
      %432 = vmatpush1.msra.mxu0 %v355
      %433 = vmatprep.subr.mxu0 %v358
      %434 = vmatpush1.msra.mxu0 %v357
      %435 = vmatprep.subr.mxu0 %v360
      %436 = vmatpush1.msra.mxu0 %v359
      %437 = vmatprep.subr.mxu0 %v362
      %438 = vmatpush1.msra.mxu0 %v361
      %439 = vmatprep.subr.mxu0 %v364
      %440 = vmatpush1.msra.mxu0 %v363
      %441 = vmatprep.subr.mxu0 %v366
      %442 = vmatpush1.msra.mxu0 %v365
      %443 = vmatprep.subr.mxu0 %v368
      %444 = vmatpush1.msra.mxu0 %v367
      %445 = vmatprep.subr.mxu0 %v370
      %446 = vmatpush1.msra.mxu0 %v369
      %447 = vmatprep.subr.mxu0 %v372
      %448 = vmatpush1.msra.mxu0 %v371
      %449 = vmatprep.subr.mxu0 %v374
      %450 = vmatpush1.msra.mxu0 %v373
      %451 = vmatprep.subr.mxu0 %v376
      %452 = vmatpush1.msra.mxu0 %v375
      %453 = vmatprep.subr.mxu0 %v378
      %454 = vmatpush1.msra.mxu0 %v377
      %455 = vmatprep.subr.mxu0 %v380
      %456 = vmatpush1.msra.mxu0 %v379
      %457 = vmatprep.subr.mxu0 %v382
      %458 = vmatpush1.msra.mxu0 %v381
      %459 = vmatprep.subr.mxu0 %v384
      %460 = vmatpush1.msra.mxu0 %v383
      %461 = vmatprep.subr.mxu0 %v386
      %462 = vmatpush1.msra.mxu0 %v385
      %463 = vmatprep.subr.mxu0 %v388
      %464 = vmatpush1.msra.mxu0 %v387
      %465 = vmatprep.subr.mxu0 %v390
      %466 = vmatpush1.msra.mxu0 %v389
      %467 = vmatprep.subr.mxu0 %v392
      %468 = vmatpush1.msra.mxu0 %v391
      %469 = vmatprep.subr.mxu0 %v394
      %470 = vmatpush1.msra.mxu0 %v393
      %471 = vmatprep.subr.mxu0 %v396
      %472 = vmatpush1.msra.mxu0 %v395
      %473 = vmatprep.subr.mxu0 %v398
      %474 = vmatpush1.msra.mxu0 %v397
      %475 = vmatprep.mubr.f32.mxu0 %v334
      %476 = vmatmul.mubr.f32.gmra.mrb[0].mxu0 %v333
      %v477 = vpop.f32.mrb[0].mxu0
      %v478 = vadd.f32 %v404, %v477
      %v479 = vpop.f32.mrb[0].mxu0
      %v480 = vadd.f32 %v408, %v479
      %481 = vdwg.mxu0
      %v482 = vmax.f32 %v478, 0.0
      %v483 = vmax.f32 %v480, 0.0
      %v484 = vld [vmem:[%s3] sm:$0xff]
      %v485 = vld [vmem:[%s3 + $0x8] sm:$0xff]
      %v486 = vld [vmem:[%s3 + $0x10] sm:$0xff]
      %v487 = vld [vmem:[%s3 + $0x18] sm:$0xff]
      %v488 = vld [vmem:[%s3 + $0x20] sm:$0xff]
      %v489 = vld [vmem:[%s3 + $0x28] sm:$0xff]
      %v490 = vld [vmem:[%s3 + $0x30] sm:$0xff]
      %v491 = vld [vmem:[%s3 + $0x38] sm:$0xff]
      %v492 = vld [vmem:[%s3 + $0x40] sm:$0xff]
      %v493 = vld [vmem:[%s3 + $0x48] sm:$0xff]
      %v494 = vld [vmem:[%s3 + $0x50] sm:$0xff]
      %v495 = vld [vmem:[%s3 + $0x58] sm:$0xff]
      %v496 = vld [vmem:[%s3 + $0x60] sm:$0xff]
      %v497 = vld [vmem:[%s3 + $0x68] sm:$0xff]
      %v498 = vld [vmem:[%s3 + $0x70] sm:$0xff]
      %v499 = vld [vmem:[%s3 + $0x78] sm:$0xff]
      %v500 = vld [vmem:[%s3 + $0x80] sm:$0xff]
      %v501 = vld [vmem:[%s3 + $0x88] sm:$0xff]
      %v502 = vld [vmem:[%s3 + $0x90] sm:$0xff]
      %v503 = vld [vmem:[%s3 + $0x98] sm:$0xff]
      %v504 = vld [vmem:[%s3 + $0xa0] sm:$0xff]
      %v505 = vld [vmem:[%s3 + $0xa8] sm:$0xff]
      %v506 = vld [vmem:[%s3 + $0xb0] sm:$0xff]
      %v507 = vld [vmem:[%s3 + $0xb8] sm:$0xff]
      %v508 = vld [vmem:[%s4] sm:$0x1]
      %v510 = vlaneseq
      %v511 = vshrl.u32 %v510, 7
      %v512 = vsub.s32 0, %v511
      %v513 = vrot.slane %v508, %v512
      %vm515 = vcmask 523264
      %v517 = vsel %vm515, %v483, 0
      %519 = vmatprep.subr.mxu0 0.0
      %520 = vmatpush1.msra.mxu0 %v484
      %521 = vmatprep.subr.mxu0 0.0
      %522 = vmatpush1.msra.mxu0 %v485
      %523 = vmatprep.subr.mxu0 0.0
      %524 = vmatpush1.msra.mxu0 %v486
      %525 = vmatprep.subr.mxu0 0.0
      %526 = vmatpush1.msra.mxu0 %v487
      %527 = vmatprep.subr.mxu0 0.0
      %528 = vmatpush1.msra.mxu0 %v488
      %529 = vmatprep.subr.mxu0 0.0
      %530 = vmatpush1.msra.mxu0 %v489
      %531 = vmatprep.subr.mxu0 0.0
      %532 = vmatpush1.msra.mxu0 %v490
      %533 = vmatprep.subr.mxu0 0.0
      %534 = vmatpush1.msra.mxu0 %v491
      %535 = vmatprep.subr.mxu0 0.0
      %536 = vmatpush1.msra.mxu0 %v492
      %537 = vmatprep.subr.mxu0 0.0
      %538 = vmatpush1.msra.mxu0 %v493
      %539 = vmatprep.subr.mxu0 0.0
      %540 = vmatpush1.msra.mxu0 %v494
      %541 = vmatprep.subr.mxu0 0.0
      %542 = vmatpush1.msra.mxu0 %v495
      %543 = vmatprep.subr.mxu0 0.0
      %544 = vmatpush1.msra.mxu0 %v496
      %545 = vmatprep.subr.mxu0 0.0
      %546 = vmatpush1.msra.mxu0 %v497
      %547 = vmatprep.subr.mxu0 0.0
      %548 = vmatpush1.msra.mxu0 %v498
      %549 = vmatprep.subr.mxu0 0.0
      %550 = vmatpush1.msra.mxu0 %v499
      %551 = vmatprep.subr.mxu0 0.0
      %552 = vmatpush1.msra.mxu0 %v500
      %553 = vmatprep.subr.mxu0 0.0
      %554 = vmatpush1.msra.mxu0 %v501
      %555 = vmatprep.subr.mxu0 0.0
      %556 = vmatpush1.msra.mxu0 %v502
      %557 = vmatprep.subr.mxu0 0.0
      %558 = vmatpush1.msra.mxu0 %v503
      %559 = vmatprep.subr.mxu0 0.0
      %560 = vmatpush1.msra.mxu0 %v504
      %561 = vmatprep.subr.mxu0 0.0
      %562 = vmatpush1.msra.mxu0 %v505
      %563 = vmatprep.subr.mxu0 0.0
      %564 = vmatpush1.msra.mxu0 %v506
      %565 = vmatprep.subr.mxu0 0.0
      %566 = vmatpush1.msra.mxu0 %v507
      %567 = vmatprep.subr.mxu0 0.0
      %568 = vmatpush1.msra.mxu0 0.0
      %569 = vmatprep.subr.mxu0 0.0
      %570 = vmatpush1.msra.mxu0 0.0
      %571 = vmatprep.subr.mxu0 0.0
      %572 = vmatpush1.msra.mxu0 0.0
      %573 = vmatprep.subr.mxu0 0.0
      %574 = vmatpush1.msra.mxu0 0.0
      %575 = vmatprep.subr.mxu0 0.0
      %576 = vmatpush1.msra.mxu0 0.0
      %577 = vmatprep.subr.mxu0 0.0
      %578 = vmatpush1.msra.mxu0 0.0
      %579 = vmatprep.subr.mxu0 0.0
      %580 = vmatpush1.msra.mxu0 0.0
      %581 = vmatprep.subr.mxu0 0.0
      %582 = vmatpush1.msra.mxu0 0.0
      %583 = vmatprep.mubr.f32.mxu0 %v517
      %584 = vmatmul.mubr.f32.gmra.mrb[0].mxu0 %v482
      %v585 = vpop.f32.mrb[0].mxu0
      %v586 = vadd.f32 %v513, %v585
      %v587 = vpop.f32.mrb[0].mxu0
      %588 = vdwg.mxu0
      %v589 = vmax.f32 %v586, 0.0
      %v590 = vld [vmem:[%s5] sm:$0xff]
      %v591 = vld [vmem:[%s5 + $0x8] sm:$0xff]
      %v592 = vld [vmem:[%s5 + $0x10] sm:$0xff]
      %v593 = vld [vmem:[%s5 + $0x18] sm:$0xff]
      %v594 = vld [vmem:[%s5 + $0x20] sm:$0xff]
      %v595 = vld [vmem:[%s5 + $0x28] sm:$0xff]
      %v596 = vld [vmem:[%s5 + $0x30] sm:$0xff]
      %v597 = vld [vmem:[%s5 + $0x38] sm:$0xff]
      %v598 = vld [vmem:[%s5 + $0x40] sm:$0xff]
      %v599 = vld [vmem:[%s5 + $0x48] sm:$0xff]
      %v600 = vld [vmem:[%s5 + $0x50] sm:$0xff]
      %v601 = vld [vmem:[%s5 + $0x58] sm:$0xff]
      %v602 = vld [vmem:[%s5 + $0x60] sm:$0xff]
      %v603 = vld [vmem:[%s5 + $0x68] sm:$0xff]
      %v604 = vld [vmem:[%s5 + $0x70] sm:$0xff]
      %v605 = vld [vmem:[%s5 + $0x78] sm:$0xff]
      %v606 = vld [vmem:[%s5 + $0x80] sm:$0xff]
      %v607 = vld [vmem:[%s5 + $0x88] sm:$0xff]
      %v608 = vld [vmem:[%s5 + $0x90] sm:$0xff]
      %v609 = vld [vmem:[%s5 + $0x98] sm:$0xff]
      %v610 = vld [vmem:[%s5 + $0xa0] sm:$0xff]
      %v611 = vld [vmem:[%s5 + $0xa8] sm:$0xff]
      %v612 = vld [vmem:[%s5 + $0xb0] sm:$0xff]
      %v613 = vld [vmem:[%s5 + $0xb8] sm:$0xff]
      %v614 = vld [vmem:[%s6] sm:$0x3]
      %v616 = vlaneseq
      %v617 = vshrl.u32 %v616, 7
      %v618 = vsub.s32 0, %v617
      %v619 = vrot.slane %v614, %v618
      %v620 = vlaneseq
      %v621 = vshrl.u32 %v620, 7
      %v622 = vsub.s32 1, %v621
      %v623 = vrot.slane %v614, %v622
      %vm626 = vcmask 785408
      %v628 = vsel %vm626, %v589, 0
      %630 = vmatprep.subr.mxu0 %v591
      %631 = vmatpush1.msra.mxu0 %v590
      %632 = vmatprep.subr.mxu0 %v593
      %633 = vmatpush1.msra.mxu0 %v592
      %634 = vmatprep.subr.mxu0 %v595
      %635 = vmatpush1.msra.mxu0 %v594
      %636 = vmatprep.subr.mxu0 %v597
      %637 = vmatpush1.msra.mxu0 %v596
      %638 = vmatprep.subr.mxu0 %v599
      %639 = vmatpush1.msra.mxu0 %v598
      %640 = vmatprep.subr.mxu0 %v601
      %641 = vmatpush1.msra.mxu0 %v600
      %642 = vmatprep.subr.mxu0 %v603
      %643 = vmatpush1.msra.mxu0 %v602
      %644 = vmatprep.subr.mxu0 %v605
      %645 = vmatpush1.msra.mxu0 %v604
      %646 = vmatprep.subr.mxu0 %v607
      %647 = vmatpush1.msra.mxu0 %v606
      %648 = vmatprep.subr.mxu0 %v609
      %649 = vmatpush1.msra.mxu0 %v608
      %650 = vmatprep.subr.mxu0 %v611
      %651 = vmatpush1.msra.mxu0 %v610
      %652 = vmatprep.subr.mxu0 %v613
      %653 = vmatpush1.msra.mxu0 %v612
      %654 = vmatprep.subr.mxu0 0.0
      %655 = vmatpush1.msra.mxu0 0.0
      %656 = vmatprep.subr.mxu0 0.0
      %657 = vmatpush1.msra.mxu0 0.0
      %658 = vmatprep.subr.mxu0 0.0
      %659 = vmatpush1.msra.mxu0 0.0
      %660 = vmatprep.subr.mxu0 0.0
      %661 = vmatpush1.msra.mxu0 0.0
      %662 = vmatprep.subr.mxu0 0.0
      %663 = vmatpush1.msra.mxu0 0.0
      %664 = vmatprep.subr.mxu0 0.0
      %665 = vmatpush1.msra.mxu0 0.0
      %666 = vmatprep.subr.mxu0 0.0
      %667 = vmatpush1.msra.mxu0 0.0
      %668 = vmatprep.subr.mxu0 0.0
      %669 = vmatpush1.msra.mxu0 0.0
      %670 = vmatprep.subr.mxu0 0.0
      %671 = vmatpush1.msra.mxu0 0.0
      %672 = vmatprep.subr.mxu0 0.0
      %673 = vmatpush1.msra.mxu0 0.0
      %674 = vmatprep.subr.mxu0 0.0
      %675 = vmatpush1.msra.mxu0 0.0
      %676 = vmatprep.subr.mxu0 0.0
      %677 = vmatpush1.msra.mxu0 0.0
      %678 = vmatprep.subr.mxu0 0.0
      %679 = vmatpush1.msra.mxu0 0.0
      %680 = vmatprep.subr.mxu0 0.0
      %681 = vmatpush1.msra.mxu0 0.0
      %682 = vmatprep.subr.mxu0 0.0
      %683 = vmatpush1.msra.mxu0 0.0
      %684 = vmatprep.subr.mxu0 0.0
      %685 = vmatpush1.msra.mxu0 0.0
      %686 = vmatprep.subr.mxu0 0.0
      %687 = vmatpush1.msra.mxu0 0.0
      %688 = vmatprep.subr.mxu0 0.0
      %689 = vmatpush1.msra.mxu0 0.0
      %690 = vmatprep.subr.mxu0 0.0
      %691 = vmatpush1.msra.mxu0 0.0
      %692 = vmatprep.subr.mxu0 0.0
      %693 = vmatpush1.msra.mxu0 0.0
      %694 = vmatprep.mubr.f32.mxu0 0.0
      %695 = vmatmul.mubr.f32.gmra.mrb[0].mxu0 %v628
      %v696 = vpop.f32.mrb[0].mxu0
      %v697 = vadd.f32 %v619, %v696
      %v698 = vpop.f32.mrb[0].mxu0
      %v699 = vadd.f32 %v623, %v698
      %700 = vdwg.mxu0
      %v701 = vmax.f32 %v697, 0.0
      %v702 = vmax.f32 %v699, 0.0
      %v703 = vld [vmem:[%s7] sm:$0xff]
      %v704 = vld [vmem:[%s7 + $0x8] sm:$0xff]
      %v705 = vld [vmem:[%s7 + $0x10] sm:$0xff]
      %v706 = vld [vmem:[%s7 + $0x18] sm:$0xff]
      %v707 = vld [vmem:[%s7 + $0x20] sm:$0xff]
      %v708 = vld [vmem:[%s7 + $0x28] sm:$0xff]
      %v709 = vld [vmem:[%s7 + $0x30] sm:$0xff]
      %v710 = vld [vmem:[%s7 + $0x38] sm:$0xff]
      %v711 = vld [vmem:[%s7 + $0x40] sm:$0xff]
      %v712 = vld [vmem:[%s7 + $0x48] sm:$0xff]
      %v713 = vld [vmem:[%s7 + $0x50] sm:$0xff]
      %v714 = vld [vmem:[%s7 + $0x58] sm:$0xff]
      %v715 = vld [vmem:[%s7 + $0x60] sm:$0xff]
      %v716 = vld [vmem:[%s7 + $0x68] sm:$0xff]
      %v717 = vld [vmem:[%s7 + $0x70] sm:$0xff]
      %v718 = vld [vmem:[%s7 + $0x78] sm:$0xff]
      %v719 = vld [vmem:[%s7 + $0x80] sm:$0xff]
      %v720 = vld [vmem:[%s7 + $0x88] sm:$0xff]
      %v721 = vld [vmem:[%s7 + $0x90] sm:$0xff]
      %v722 = vld [vmem:[%s7 + $0x98] sm:$0xff]
      %v723 = vld [vmem:[%s7 + $0xa0] sm:$0xff]
      %v724 = vld [vmem:[%s7 + $0xa8] sm:$0xff]
      %v725 = vld [vmem:[%s7 + $0xb0] sm:$0xff]
      %v726 = vld [vmem:[%s7 + $0xb8] sm:$0xff]
      %v727 = vld [vmem:[%s7 + $0xc0] sm:$0xff]
      %v728 = vld [vmem:[%s7 + $0xc8] sm:$0xff]
      %v729 = vld [vmem:[%s7 + $0xd0] sm:$0xff]
      %v730 = vld [vmem:[%s7 + $0xd8] sm:$0xff]
      %v731 = vld [vmem:[%s7 + $0xe0] sm:$0xff]
      %v732 = vld [vmem:[%s7 + $0xe8] sm:$0xff]
      %v733 = vld [vmem:[%s7 + $0xf0] sm:$0xff]
      %v734 = vld [vmem:[%s7 + $0xf8] sm:$0xff]
      %v735 = vld [vmem:[%s7 + $0x100] sm:$0xff]
      %v736 = vld [vmem:[%s7 + $0x108] sm:$0xff]
      %v737 = vld [vmem:[%s7 + $0x110] sm:$0xff]
      %v738 = vld [vmem:[%s7 + $0x118] sm:$0xff]
      %v739 = vld [vmem:[%s7 + $0x120] sm:$0xff]
      %v740 = vld [vmem:[%s7 + $0x128] sm:$0xff]
      %v741 = vld [vmem:[%s7 + $0x130] sm:$0xff]
      %v742 = vld [vmem:[%s7 + $0x138] sm:$0xff]
      %v743 = vld [vmem:[%s7 + $0x140] sm:$0xff]
      %v744 = vld [vmem:[%s7 + $0x148] sm:$0xff]
      %v745 = vld [vmem:[%s7 + $0x150] sm:$0xff]
      %v746 = vld [vmem:[%s7 + $0x158] sm:$0xff]
      %v747 = vld [vmem:[%s7 + $0x160] sm:$0xff]
      %v748 = vld [vmem:[%s7 + $0x168] sm:$0xff]
      %v749 = vld [vmem:[%s7 + $0x170] sm:$0xff]
      %v750 = vld [vmem:[%s7 + $0x178] sm:$0xff]
      %v751 = vld [vmem:[%s8] sm:$0x3]
      %v753 = vlaneseq
      %v754 = vshrl.u32 %v753, 7
      %v755 = vsub.s32 0, %v754
      %v756 = vrot.slane %v751, %v755
      %v757 = vlaneseq
      %v758 = vshrl.u32 %v757, 7
      %v759 = vsub.s32 1, %v758
      %v760 = vrot.slane %v751, %v759
      %v764 = vsel %vm515, %v702, 0
      %766 = vmatprep.subr.mxu0 %v704
      %767 = vmatpush1.msra.mxu0 %v703
      %768 = vmatprep.subr.mxu0 %v706
      %769 = vmatpush1.msra.mxu0 %v705
      %770 = vmatprep.subr.mxu0 %v708
      %771 = vmatpush1.msra.mxu0 %v707
      %772 = vmatprep.subr.mxu0 %v710
      %773 = vmatpush1.msra.mxu0 %v709
      %774 = vmatprep.subr.mxu0 %v712
      %775 = vmatpush1.msra.mxu0 %v711
      %776 = vmatprep.subr.mxu0 %v714
      %777 = vmatpush1.msra.mxu0 %v713
      %778 = vmatprep.subr.mxu0 %v716
      %779 = vmatpush1.msra.mxu0 %v715
      %780 = vmatprep.subr.mxu0 %v718
      %781 = vmatpush1.msra.mxu0 %v717
      %782 = vmatprep.subr.mxu0 %v720
      %783 = vmatpush1.msra.mxu0 %v719
      %784 = vmatprep.subr.mxu0 %v722
      %785 = vmatpush1.msra.mxu0 %v721
      %786 = vmatprep.subr.mxu0 %v724
      %787 = vmatpush1.msra.mxu0 %v723
      %788 = vmatprep.subr.mxu0 %v726
      %789 = vmatpush1.msra.mxu0 %v725
      %790 = vmatprep.subr.mxu0 %v728
      %791 = vmatpush1.msra.mxu0 %v727
      %792 = vmatprep.subr.mxu0 %v730
      %793 = vmatpush1.msra.mxu0 %v729
      %794 = vmatprep.subr.mxu0 %v732
      %795 = vmatpush1.msra.mxu0 %v731
      %796 = vmatprep.subr.mxu0 %v734
      %797 = vmatpush1.msra.mxu0 %v733
      %798 = vmatprep.subr.mxu0 %v736
      %799 = vmatpush1.msra.mxu0 %v735
      %800 = vmatprep.subr.mxu0 %v738
      %801 = vmatpush1.msra.mxu0 %v737
      %802 = vmatprep.subr.mxu0 %v740
      %803 = vmatpush1.msra.mxu0 %v739
      %804 = vmatprep.subr.mxu0 %v742
      %805 = vmatpush1.msra.mxu0 %v741
      %806 = vmatprep.subr.mxu0 %v744
      %807 = vmatpush1.msra.mxu0 %v743
      %808 = vmatprep.subr.mxu0 %v746
      %809 = vmatpush1.msra.mxu0 %v745
      %810 = vmatprep.subr.mxu0 %v748
      %811 = vmatpush1.msra.mxu0 %v747
      %812 = vmatprep.subr.mxu0 %v750
      %813 = vmatpush1.msra.mxu0 %v749
      %814 = vmatprep.subr.mxu0 0.0
      %815 = vmatpush1.msra.mxu0 0.0
      %816 = vmatprep.subr.mxu0 0.0
      %817 = vmatpush1.msra.mxu0 0.0
      %818 = vmatprep.subr.mxu0 0.0
      %819 = vmatpush1.msra.mxu0 0.0
      %820 = vmatprep.subr.mxu0 0.0
      %821 = vmatpush1.msra.mxu0 0.0
      %822 = vmatprep.subr.mxu0 0.0
      %823 = vmatpush1.msra.mxu0 0.0
      %824 = vmatprep.subr.mxu0 0.0
      %825 = vmatpush1.msra.mxu0 0.0
      %826 = vmatprep.subr.mxu0 0.0
      %827 = vmatpush1.msra.mxu0 0.0
      %828 = vmatprep.subr.mxu0 0.0
      %829 = vmatpush1.msra.mxu0 0.0
      %830 = vmatprep.mubr.f32.mxu0 %v764
      %831 = vmatmul.mubr.f32.gmra.mrb[0].mxu0 %v701
      %v832 = vpop.f32.mrb[0].mxu0
      %v833 = vadd.f32 %v756, %v832
      %v834 = vpop.f32.mrb[0].mxu0
      %v835 = vadd.f32 %v760, %v834
      %836 = vdwg.mxu0
      %837 = vst [vmem:[%s332] sm:$0xff] %v833
      %838 = vst [vmem:[%s332 + $0x8] sm:$0xff] %v835
      %p839 = scmp.lt.s32.totalorder %s20, 2
      %s840 = scalar_select %p839, %s20, 2
      %s841 = smul.addr %s840, 2
      %s842 = smul.addr %s841, 8
      %s843 = scalar_lea.vmem %s9, %s842
      // Predicated region
      $region57: #{pallas_ae_forward.1} parent=55 // pred_check
        %p844 = pneg %p232
      $region58: #{pallas_ae_forward.1} parent=55 // pred_check_branch
        %846 = sbr.rel (%p844) target = $region60
      $region59: #{pallas_ae_forward.1} parent=55 // pred_region
        _
      $region60: #{pallas_ae_forward.1} parent=55 // pred_fallthru
        _
    $region56: #{pallas_ae_forward.1} parent=5 // pred_fallthru
      _
    %p847 = scmp.le.s32.totalorder 2, %s15
    // Predicated region
    $region61: #{pallas_ae_forward.1} parent=5 // pred_check
      %p848 = pneg %p847
    $region62: #{pallas_ae_forward.1} parent=5 // pred_check_branch
      %850 = sbr.rel (%p848) target = $region64
    $region63: #{pallas_ae_forward.1} parent=5 // pred_region
      %s851 = ssub.s32 %s15, 2
      // Predicated region
      $region65: #{pallas_ae_forward.1} parent=63 // pred_check
        %p852 = pneg %p238
      $region66: #{pallas_ae_forward.1} parent=63 // pred_check_branch
        %854 = sbr.rel (%p852) target = $region68
      $region67: #{pallas_ae_forward.1} parent=63 // pred_region
        %p855 = scmp.lt.s32.totalorder %s21, 2
        %s856 = scalar_select %p855, %s21, 2
        %s857 = smul.addr %s856, 2
        %s858 = smul.addr %s857, 8
        %s859 = scalar_lea.vmem %s9, %s858
      $region68: #{pallas_ae_forward.1} parent=63 // pred_fallthru
        _
    $region64: #{pallas_ae_forward.1} parent=5 // pred_fallthru
      _
  $region6: #{pallas_ae_forward.1} parent=0 // loop_footer
    %s19 = sadd.s32 1, %s15
  $region7: #{pallas_ae_forward.1} parent=0 // loop_footer_branch
    %14 = sbr.rel target = $region3
  $region8: #{pallas_ae_forward.1} parent=0 // loop_exit
    _

</llo_original>
